<compile_context>
chip_gen: v7x
topology: tpu7x:2x2x1
jax: 0.10.0
libtpu: 0.0.40
codegen_flags: <defaults>
</compile_context>

<pallas_src>
import functools

import jax
import jax.numpy as jnp
from jax.experimental import pallas as pl
from jax.experimental.pallas import tpu as pltpu

LAMDA = 0.1                              # default lamda of LTLoss
_TARGET_BLOCK_BYTES = 2 * 1024 * 1024    # ~2 MiB streamed per grid step


def _lt_loss_kernel(pred_ref, tgt_ref, cnt_ref, reg_ref, *, hw):
    # pred_ref: (TB, 3*HW)  -- channels laid out contiguously along lanes
    # tgt_ref : (TB, 2*HW)
    t0 = pred_ref[:, 0:hw].astype(jnp.float32)
    t1 = pred_ref[:, hw:2 * hw].astype(jnp.float32)
    bb = pred_ref[:, 2 * hw:3 * hw].astype(jnp.float32)
    gt0 = tgt_ref[:, 0:hw].astype(jnp.float32)
    gt1 = tgt_ref[:, hw:2 * hw].astype(jnp.float32)

    p = t0 * gt0 * t1                    # (TB, HW)
    diff = p + bb - gt1                  # (TB, HW)

    # count-loss partial for this block: one SSE scalar (reduce hides under DMA).
    cnt_ref[...] = jnp.sum(diff * diff).reshape(1, 1, 1)

    # reg-loss partial: per-batch-element sum_HW(p - GT0)  (== sum p - sum GT0);
    # squared and averaged in the wrapper epilogue.
    reg_ref[...] = jnp.sum(p - gt0, axis=-1, keepdims=True)[None, :, :]


def lt_loss(pred, target, lamda=LAMDA):
    """Pallas implementation of LTLoss.forward (type='MSE')."""
    n, cp, h, w = pred.shape
    ct = target.shape[1]
    assert cp >= 3 and ct >= 2
    hw = h * w

    # Drop channels the loss never reads (pure wasted HBM bandwidth otherwise).
    if cp > 3:
        pred = pred[:, :3]
    if ct > 2:
        target = target[:, :2]

    # Lane-dense, contiguous (free) reshape: (N, C, H, W) -> (N, C*H*W).
    pred2 = pred.reshape(n, 3 * hw)
    tgt2 = target.reshape(n, 2 * hw)

    # Batch tile size: stream ~_TARGET_BLOCK_BYTES per grid step.
    itemsize = jnp.dtype(pred.dtype).itemsize
    per_elem_bytes = 5 * hw * itemsize
    tb = max(1, _TARGET_BLOCK_BYTES // per_elem_bytes)
    if tb >= n:
        tb = n                           # one block spans the full batch dim
    else:
        tb = max(8, (tb // 8) * 8)       # sublane-dense, satisfies (8,128) rule
    nb = pl.cdiv(n, tb)
    n_pad = nb * tb
    if n_pad != n:
        # Zero padding contributes exactly 0 to both partial sums.
        pred2 = jnp.pad(pred2, ((0, n_pad - n), (0, 0)))
        tgt2 = jnp.pad(tgt2, ((0, n_pad - n), (0, 0)))

    kernel = functools.partial(_lt_loss_kernel, hw=hw)

    # Double-buffered inputs + headroom; stay within every generation's VMEM.
    block_bytes = tb * 5 * hw * itemsize
    vmem_limit = int(min(64 * 2**20, max(32 * 2**20, 3 * block_bytes)))

    cnt_part, reg_part = pl.pallas_call(
        kernel,
        out_shape=(
            jax.ShapeDtypeStruct((nb, 1, 1), jnp.float32),   # per-block count SSE
            jax.ShapeDtypeStruct((nb, tb, 1), jnp.float32),  # per-batch reg sums
        ),
        grid_spec=pltpu.PrefetchScalarGridSpec(
            num_scalar_prefetch=0,
            grid=(nb,),
            in_specs=[
                pl.BlockSpec((tb, 3 * hw), lambda i: (i, 0)),
                pl.BlockSpec((tb, 2 * hw), lambda i: (i, 0)),
            ],
            out_specs=(
                pl.BlockSpec((1, 1, 1), lambda i: (i, 0, 0)),
                pl.BlockSpec((1, tb, 1), lambda i: (i, 0, 0)),
            ),
        ),
        compiler_params=pltpu.CompilerParams(
            dimension_semantics=("parallel",),
            vmem_limit_bytes=vmem_limit,
        ),
    )(pred2, tgt2)

    # Tiny epilogue: means + lamda combine (O(N) elements; padded rows are 0).
    count_loss = jnp.sum(cnt_part) / jnp.float32(n * hw)
    d = reg_part[..., 0]                                   # (nb, tb)
    reg_loss = jnp.sum(d * d) / jnp.float32(n)
    return count_loss + jnp.float32(lamda) * reg_loss


def lt_loss_ref(pred, target, lamda=LAMDA):
    """Plain-JAX reference mirroring the PyTorch module."""
    t0, t1, bb = pred[:, 0], pred[:, 1], pred[:, 2]
    gt0, gt1 = target[:, 0], target[:, 1]
    p = t0 * gt0 * t1
    pred_sum = p.sum(axis=(1, 2))
    gt0_sum = gt0.sum(axis=(1, 2))
    reg_loss = jnp.mean((pred_sum - gt0_sum) ** 2)
    count_loss = jnp.mean((p + bb - gt1) ** 2)
    return count_loss + lamda * reg_loss


if __name__ == "__main__":
    key = jax.random.PRNGKey(0)
    k1, k2 = jax.random.split(key)

    N, H, W = 2, 16, 16
    pred = jax.random.normal(k1, (N, 3, H, W), dtype=jnp.float32)
    target = jax.random.normal(k2, (N, 2, H, W), dtype=jnp.float32)

    loss = jax.block_until_ready(lt_loss(pred, target))
    ref = jax.block_until_ready(lt_loss_ref(pred, target))

    assert jnp.allclose(loss, ref, rtol=1e-5, atol=1e-5), (loss, ref)
    print("KERNEL_OK")
</pallas_src>

<mosaic_0001>
module attributes {stable_mosaic.version = 11 : i64} {
  func.func @_lt_loss_kernel(%arg0: i32, %arg1: memref<2x768xf32, #tpu.memory_space<vmem>>, %arg2: memref<2x512xf32, #tpu.memory_space<vmem>>, %arg3: memref<1x1x1xf32, #tpu.memory_space<vmem>>, %arg4: memref<1x2x1xf32, #tpu.memory_space<vmem>>) attributes {dimension_semantics = [#tpu.dimension_semantics<parallel>], iteration_bounds = array<i64: 1>, scalar_prefetch = 0 : i64, scratch_operands = 0 : i64, tpu.core_type = #tpu.core_type<tc>, window_params = [{transform_indices = @transform_0, window_bounds = array<i64: 2, 768>}, {transform_indices = @transform_1, window_bounds = array<i64: 2, 512>}, {transform_indices = @transform_2, window_bounds = array<i64: 1, 1, 1>}, {transform_indices = @transform_3, window_bounds = array<i64: 1, 2, 1>}]} {
    %c0 = arith.constant 0 : index
    %c0_0 = arith.constant 0 : index
    %0 = vector.load %arg1[%c0, %c0_0] : memref<2x768xf32, #tpu.memory_space<vmem>>, vector<2x256xf32>
    %c0_1 = arith.constant 0 : index
    %c256 = arith.constant 256 : index
    %1 = vector.load %arg1[%c0_1, %c256] : memref<2x768xf32, #tpu.memory_space<vmem>>, vector<2x256xf32>
    %c0_2 = arith.constant 0 : index
    %c512 = arith.constant 512 : index
    %2 = vector.load %arg1[%c0_2, %c512] : memref<2x768xf32, #tpu.memory_space<vmem>>, vector<2x256xf32>
    %c0_3 = arith.constant 0 : index
    %c0_4 = arith.constant 0 : index
    %3 = vector.load %arg2[%c0_3, %c0_4] : memref<2x512xf32, #tpu.memory_space<vmem>>, vector<2x256xf32>
    %c0_5 = arith.constant 0 : index
    %c256_6 = arith.constant 256 : index
    %4 = vector.load %arg2[%c0_5, %c256_6] : memref<2x512xf32, #tpu.memory_space<vmem>>, vector<2x256xf32>
    %5 = arith.mulf %0, %3 : vector<2x256xf32>
    %6 = arith.mulf %5, %1 : vector<2x256xf32>
    %7 = arith.addf %6, %2 : vector<2x256xf32>
    %8 = arith.subf %7, %4 : vector<2x256xf32>
    %9 = arith.mulf %8, %8 : vector<2x256xf32>
    %10 = vector.shape_cast %9 : vector<2x256xf32> to vector<1x2x256xf32>
    %cst = arith.constant dense<0.000000e+00> : vector<1xf32>
    %11 = vector.multi_reduction <add>, %10, %cst [1, 2] : vector<1x2x256xf32> to vector<1xf32>
    %12 = vector.shape_cast %11 : vector<1xf32> to vector<1x1x1xf32>
    %13 = vector.extract %12[0, 0, 0] : f32 from vector<1x1x1xf32>
    %14 = vector.broadcast %13 : f32 to vector<1x1x1xf32>
    %c0_7 = arith.constant 0 : index
    %c0_8 = arith.constant 0 : index
    %c0_9 = arith.constant 0 : index
    %15 = vector.load %arg3[%c0_7, %c0_8, %c0_9] : memref<1x1x1xf32, #tpu.memory_space<vmem>>, vector<1x1x1xf32>
    tpu.vector_store %arg3[%c0_7, %c0_8, %c0_9], %14 {strides = array<i32>} : memref<1x1x1xf32, #tpu.memory_space<vmem>>, vector<1x1x1xf32>,
    %16 = arith.subf %6, %3 : vector<2x256xf32>
    %cst_10 = arith.constant dense<0.000000e+00> : vector<2xf32>
    %17 = vector.multi_reduction <add>, %16, %cst_10 [1] : vector<2x256xf32> to vector<2xf32>
    %18 = vector.shape_cast %17 : vector<2xf32> to vector<2x1xf32>
    %19 = vector.shape_cast %18 : vector<2x1xf32> to vector<1x2x1xf32>
    %c0_11 = arith.constant 0 : index
    %c0_12 = arith.constant 0 : index
    %c0_13 = arith.constant 0 : index
    %20 = vector.load %arg4[%c0_11, %c0_12, %c0_13] : memref<1x2x1xf32, #tpu.memory_space<vmem>>, vector<1x2x1xf32>
    tpu.vector_store %arg4[%c0_11, %c0_12, %c0_13], %19 {strides = array<i32>} : memref<1x2x1xf32, #tpu.memory_space<vmem>>, vector<1x2x1xf32>,
    return
  }
  func.func @transform_0(%arg0: i32) -> (i32, i32) {
    %c0_i32 = arith.constant 0 : i32
    %c0_i32_0 = arith.constant 0 : i32
    return %arg0, %c0_i32 : i32, i32
  }
  func.func @transform_1(%arg0: i32) -> (i32, i32) {
    %c0_i32 = arith.constant 0 : i32
    %c0_i32_0 = arith.constant 0 : i32
    return %arg0, %c0_i32 : i32, i32
  }
  func.func @transform_2(%arg0: i32) -> (i32, i32, i32) {
    %c0_i32 = arith.constant 0 : i32
    %c0_i32_0 = arith.constant 0 : i32
    %c0_i32_1 = arith.constant 0 : i32
    return %arg0, %c0_i32, %c0_i32_0 : i32, i32, i32
  }
  func.func @transform_3(%arg0: i32) -> (i32, i32, i32) {
    %c0_i32 = arith.constant 0 : i32
    %c0_i32_0 = arith.constant 0 : i32
    %c0_i32_1 = arith.constant 0 : i32
    return %arg0, %c0_i32, %c0_i32_0 : i32, i32, i32
  }
}

</mosaic_0001>

<llo_original>
// kernel: tpu_custom_call.1
$region0: #{tpu_custom_call.1}
  #allocation0 [shape = 'u32[]', space=smem, size = 0x4, offset = 0x4, fixed_abs, tag = 'smem constant byte address 0x4 - core index']
  #allocation1 [shape = 'u32[144,128]{1,0:T(1,128)}', space=vmem, size = 0x12000, scoped, tag = 'internal scratch']
  %s0 = inlined_call_operand.hbm [shape: f32[2,768], index: 0, kind: input, shape index: {}]
  %s1 = inlined_call_operand.hbm [shape: f32[2,512], index: 1, kind: input, shape index: {}]
  %s2 = inlined_call_operand.hbm [shape: f32[1,1,1], index: 2, kind: output, shape index: {0}]
  %s3 = inlined_call_operand.vmem [shape: f32[1,2,1], index: 3, kind: output, shape index: {1}]
  %4 = xla_tuple %s2, %s3
  %s5 = sld [smem:[#allocation0]]
  $region34: #{tpu_custom_call.1} parent=0
    _
  %s7 = ssub.s32 1, %s5
  %s8 = scalar_select 0, %s7, %s5
  $region1: #{tpu_custom_call.1} parent=0
    #allocation2 [shape = 'u8[6144]{0}', space=vmem, size = 0x1800, scoped, tag = 'input window, operand 0, single buffered']
    #allocation3 [shape = 's32[1]{0}', space=sflag, size = 0x4, scoped, tag = 'scoped memory for tpu_custom_call.1']
    #allocation4 [shape = 's32[1]{0}', space=sflag, size = 0x4, scoped, tag = 'scoped memory for tpu_custom_call.1']
    #allocation5 [shape = 'u8[4096]{0}', space=vmem, size = 0x1000, scoped, tag = 'input window, operand 1, single buffered']
    #allocation6 [shape = 's32[1]{0}', space=sflag, size = 0x4, scoped, tag = 'scoped memory for tpu_custom_call.1']
    #allocation7 [shape = 'u8[512]{0}', space=vmem, size = 0x400, scoped, tag = 'output window, operand 0, single buffered']
    %9 = vsyncpa [#allocation3], 0
    %10 = vsyncpa [#allocation6], 0
    %11 = vsyncpa [#allocation4], 0
    // Predicated region
    $region2: #{tpu_custom_call.1} parent=1 // pred_check
      _
    $region3: #{tpu_custom_call.1} parent=1 // pred_check_branch
      %13 = sbr.rel (0) target = $region5
    $region4: #{tpu_custom_call.1} parent=1 // pred_region
      %s15 = ssub.s32 192, 192
      %16 = vsyncadd [#allocation3], %s15
      %s18 = sshll.u32 [#allocation2], 4
      %s19 = int_to_ptr.vmem [resolvable:$true] %s18
      %21 = dma.hbm_to_vmem [thread:$0]  %s0, 192, %s19, [#allocation3]
    $region5: #{tpu_custom_call.1} parent=1 // pred_fallthru
      _
    // Predicated region
    $region6: #{tpu_custom_call.1} parent=1 // pred_check
      _
    $region7: #{tpu_custom_call.1} parent=1 // pred_check_branch
      %23 = sbr.rel (0) target = $region9
    $region8: #{tpu_custom_call.1} parent=1 // pred_region
      %s25 = ssub.s32 128, 128
      %26 = vsyncadd [#allocation6], %s25
      %s28 = sshll.u32 [#allocation5], 4
      %s29 = int_to_ptr.vmem [resolvable:$true] %s28
      %31 = dma.hbm_to_vmem [thread:$0]  %s1, 128, %s29, [#allocation6]
    $region9: #{tpu_custom_call.1} parent=1 // pred_fallthru
      _
    // Predicated region
    $region10: #{tpu_custom_call.1} parent=1 // pred_check
      _
    $region11: #{tpu_custom_call.1} parent=1 // pred_check_branch
      %33 = sbr.rel (0) target = $region13
    $region12: #{tpu_custom_call.1} parent=1 // pred_region
      %34 = dma.done [#allocation3], 192
    $region13: #{tpu_custom_call.1} parent=1 // pred_fallthru
      _
    // Predicated region
    $region14: #{tpu_custom_call.1} parent=1 // pred_check
      _
    $region15: #{tpu_custom_call.1} parent=1 // pred_check_branch
      %36 = sbr.rel (0) target = $region17
    $region16: #{tpu_custom_call.1} parent=1 // pred_region
      %37 = dma.done [#allocation6], 128
    $region17: #{tpu_custom_call.1} parent=1 // pred_fallthru
      _
    %v38 = vld [vmem:[#allocation2] sm:$0xf]
    %v39 = vld [vmem:[#allocation2 + $0x4] sm:$0xf]
    %v40 = vld [vmem:[#allocation2 + $0x8] sm:$0xf]
    %v41 = vld [vmem:[#allocation5] sm:$0xf]
    %v42 = vld [vmem:[#allocation5 + $0x4] sm:$0xf]
    %v43 = vmul.f32 %v38, %v41
    %v44 = vmul.f32 %v43, %v39
    %v45 = vadd.f32 %v44, %v40
    %v46 = vsub.f32 %v45, %v42
    %v47 = vmul.f32 %v46, %v46
    %v50 = vunpack.c.l.s4 1983009808
    %v51 = vunpack.c.0.s8 %v50
    %v52 = vlaneseq
    %v53 = vshrl.u32 %v52, 7
    %v54 = vsub.s32 %v51, %v53
    %v55 = vrot.slane %v47, %v54
    %v56 = vcombine.high %v55, %v55
    %vm59 = vcmask 1041408
    %v60 = vsel %vm59, %v55, 0.0
    %v61 = vsel %vm59, %v56, 0.0
    %v62 = vadd.f32 %v60, %v61
    %63 = vadd.xlane.f32.xlu0 %v62
    %v64 = vpop.xlane.xlu0 %63
    %v65 = vrot.slane %v64, 4
    %v66 = vadd.f32 %v64, %v65
    %v67 = vrot.slane %v66, 2
    %v68 = vadd.f32 %v66, %v67
    %v69 = vrot.slane %v68, 1
    %v70 = vadd.f32 %v68, %v69
    %s71 = vtos %v70
    %v72 = vstv %s71
    %vm73 = vcmask 0
    %74 = vst.msk [vmem:[#allocation7] sm:$0x1] %vm73, %v72
    %v75 = vsub.f32 %v44, %v41
    %v78 = vunpack.c.l.s4 1983009808
    %v79 = vunpack.c.0.s8 %v78
    %v80 = vlaneseq
    %v81 = vshrl.u32 %v80, 7
    %v82 = vsub.s32 %v79, %v81
    %v83 = vrot.slane %v75, %v82
    %v84 = vcombine.high %v83, %v83
    %v87 = vsel %vm59, %v83, 0.0
    %v88 = vsel %vm59, %v84, 0.0
    %v89 = vadd.f32 %v87, %v88
    %90 = vadd.xlane.f32.xlu0 %v89
    %v91 = vpop.xlane.xlu0 %90
    %vm92 = vcmask 1024
    %93 = vst.msk [vmem:[%s3] sm:$0x3] %vm92, %v91
    // Predicated region
    $region18: #{tpu_custom_call.1} parent=1 // pred_check
      _
    $region19: #{tpu_custom_call.1} parent=1 // pred_check_branch
      %95 = sbr.rel (0) target = $region21
    $region20: #{tpu_custom_call.1} parent=1 // pred_region
      %s97 = ssub.s32 16, 16
      %98 = vsyncadd [#allocation4], %s97
      %s100 = sshll.u32 [#allocation7], 4
      %s101 = int_to_ptr.vmem [resolvable:$true] %s100
      %103 = dma.vmem_to_hbm [thread:$0]  %s101, 16, %s2, [#allocation4]
    $region21: #{tpu_custom_call.1} parent=1 // pred_fallthru
      _
    // Predicated region
    $region22: #{tpu_custom_call.1} parent=1 // pred_check
      _
    $region23: #{tpu_custom_call.1} parent=1 // pred_check_branch
      %105 = sbr.rel (0) target = $region25
    $region24: #{tpu_custom_call.1} parent=1 // pred_region
      _
    $region25: #{tpu_custom_call.1} parent=1 // pred_fallthru
      _
    // Predicated region
    $region26: #{tpu_custom_call.1} parent=1 // pred_check
      _
    $region27: #{tpu_custom_call.1} parent=1 // pred_check_branch
      %107 = sbr.rel (0) target = $region29
    $region28: #{tpu_custom_call.1} parent=1 // pred_region
      %108 = dma.done [#allocation4], 16
    $region29: #{tpu_custom_call.1} parent=1 // pred_fallthru
      _
    // Predicated region
    $region30: #{tpu_custom_call.1} parent=1 // pred_check
      _
    $region31: #{tpu_custom_call.1} parent=1 // pred_check_branch
      %110 = sbr.rel (0) target = $region33
    $region32: #{tpu_custom_call.1} parent=1 // pred_region
      _
    $region33: #{tpu_custom_call.1} parent=1 // pred_fallthru
      _
    %111 = vsyncpa [#allocation3], 1
    %112 = vsyncpa [#allocation6], 1
    %113 = vsyncpa [#allocation4], 1

</llo_original>
